<compile_context>
chip_gen: v6e
topology: v6e:2x2x1
jax: 0.10.0
libtpu: 0.0.40
codegen_flags: <defaults>
</compile_context>

<pallas_src>
import math

import jax
import jax.numpy as jnp
from jax.experimental import pallas as pl
from jax.experimental.pallas import tpu as pltpu


def _round_up(x: int, m: int) -> int:
    return ((x + m - 1) // m) * m


def _point_embedding_kernel(coords_ref, labels_ref, gp_ref, bias_ref,
                            bg_ref, not_obj_ref, obj_ref, out_ref):
    """One (tile_n, H) output tile.

    coords_ref : (tile_n, 2)  f32  raw pixel coords (x, y)
    labels_ref : (tile_n, 1)  i32
    gp_ref     : (2, H//2)    f32  gaussian matrix pre-scaled by 4*pi/image_size
    bias_ref   : (1, H//2)    f32  folded affine bias 2*pi*(1/S - 1)*(G0 + G1)
    bg/not_obj/obj refs : (1, H) f32
    out_ref    : (tile_n, H)  f32
    """
    c = coords_ref[...]                        # (tile_n, 2)
    x = c[:, 0:1]                              # (tile_n, 1)
    y = c[:, 1:2]

    # K=2 contraction on the VPU: two broadcast muls + adds (no MXU push/pop).
    ang = x * gp_ref[0:1, :] + y * gp_ref[1:2, :] + bias_ref[...]   # (tile_n, H2)

    labels = labels_ref[...]                   # (tile_n, 1), broadcasts over lanes
    is_bg = labels == -1
    is_no = labels == 0
    is_ob = labels == 1

    h2 = ang.shape[-1]

    def finish(pe, bg_h, no_h, ob_h):
        # additive vector select, then the background replace select
        add = jnp.where(is_no, no_h, jnp.where(is_ob, ob_h, 0.0))
        return jnp.where(is_bg, bg_h, pe + add)

    # sin / cos halves written straight into the output block (no concat temp).
    out_ref[:, :h2] = finish(jnp.sin(ang), bg_ref[:, :h2],
                             not_obj_ref[:, :h2], obj_ref[:, :h2])
    out_ref[:, h2:] = finish(jnp.cos(ang), bg_ref[:, h2:],
                             not_obj_ref[:, h2:], obj_ref[:, h2:])


def point_embedding(points, labels, gauss, bg_w, not_obj_w, obj_w,
                    *, image_size: int, tile_n: int = 1024):
    """points: (B,P,2) f32, labels: (B,P) i32 -> (B,P,H) f32."""
    B, P, _ = points.shape
    H = bg_w.shape[-1]
    H2 = gauss.shape[-1]
    assert H == 2 * H2
    N = B * P

    # Fold (p + 0.5)/S, 2c - 1 and the 2*pi scale into the gaussian matrix:
    #   2*pi*((2*(p+0.5)/S - 1) @ G) = p @ ((4*pi/S)*G) + 2*pi*(1/S - 1)*(G0+G1)
    # (O(H) one-time precompute, not a per-row wrapper prescale.)
    s = float(image_size)
    gauss = gauss.astype(jnp.float32)
    gp = (4.0 * math.pi / s) * gauss                              # (2, H2)
    bias = (2.0 * math.pi * (1.0 / s - 1.0)) * (gauss[0] + gauss[1])
    bias = bias.reshape(1, H2)

    # Large row tiles (kernel is HBM-writeback/overhead bound); pad ragged rows.
    tile_n = max(8, min(int(tile_n), _round_up(N, 8)))
    tile_n = _round_up(tile_n, 8)
    n_pad = _round_up(N, tile_n)

    coords = points.reshape(N, 2).astype(jnp.float32)
    labs = labels.reshape(N, 1).astype(jnp.int32)
    if n_pad != N:
        coords = jnp.pad(coords, ((0, n_pad - N), (0, 0)))
        # label value 2 hits none of the {-1, 0, 1} branches; rows are sliced off.
        labs = jnp.pad(labs, ((0, n_pad - N), (0, 0)), constant_values=2)

    out_flat = pl.pallas_call(
        _point_embedding_kernel,
        out_shape=jax.ShapeDtypeStruct((n_pad, H), jnp.float32),
        grid_spec=pl.GridSpec(
            grid=(n_pad // tile_n,),
            in_specs=[
                pl.BlockSpec((tile_n, 2), lambda i: (i, 0)),   # coords
                pl.BlockSpec((tile_n, 1), lambda i: (i, 0)),   # labels
                pl.BlockSpec((2, H2), lambda i: (0, 0)),       # scaled gauss (resident)
                pl.BlockSpec((1, H2), lambda i: (0, 0)),       # folded bias (resident)
                pl.BlockSpec((1, H), lambda i: (0, 0)),        # background_point.weight
                pl.BlockSpec((1, H), lambda i: (0, 0)),        # not_object_point.weight
                pl.BlockSpec((1, H), lambda i: (0, 0)),        # object_point.weight
            ],
            out_specs=pl.BlockSpec((tile_n, H), lambda i: (i, 0)),
        ),
        compiler_params=pltpu.CompilerParams(
            dimension_semantics=("parallel",)),
    )(coords, labs, gp, bias,
      bg_w.astype(jnp.float32), not_obj_w.astype(jnp.float32),
      obj_w.astype(jnp.float32))

    return out_flat[:N].reshape(B, P, H)


def _reference(points, labels, gauss, bg_w, not_obj_w, obj_w, *, image_size):
    coords = (points.astype(jnp.float32) + 0.5) / image_size
    coords = 2.0 * coords - 1.0
    proj = coords @ gauss
    ang = 2.0 * math.pi * proj
    pe = jnp.concatenate([jnp.sin(ang), jnp.cos(ang)], axis=-1)
    lab = labels[..., None]
    pe = jnp.where(lab == -1, bg_w[None, :, :], pe)
    pe = jnp.where(lab == 0, pe + not_obj_w[None, :, :], pe)
    pe = jnp.where(lab == 1, pe + obj_w[None, :, :], pe)
    return pe


if __name__ == "__main__":
    # Small, deterministic config.
    batch, nb_points, hidden, image_size = 2, 8, 32, 64
    num_pos_feats = hidden // 2

    key = jax.random.PRNGKey(0)
    k_pts, k_lab, k_g, k_bg, k_no, k_ob = jax.random.split(key, 6)

    points = jax.random.uniform(
        k_pts, (batch, nb_points, 2), dtype=jnp.float32,
        minval=0.0, maxval=float(image_size))
    labels = jax.random.randint(
        k_lab, (batch, nb_points), minval=-1, maxval=2, dtype=jnp.int32)

    # Parameters (deterministic synthetic init, shapes from __init__).
    scale = float(hidden // 2)
    gauss = scale * jax.random.normal(k_g, (2, num_pos_feats), dtype=jnp.float32)
    bg_w = jax.random.normal(k_bg, (1, hidden), dtype=jnp.float32)      # background_point.weight
    not_obj_w = jax.random.normal(k_no, (1, hidden), dtype=jnp.float32) # not_object_point.weight
    obj_w = jax.random.normal(k_ob, (1, hidden), dtype=jnp.float32)     # object_point.weight

    out = point_embedding(points, labels, gauss, bg_w, not_obj_w, obj_w,
                          image_size=image_size)
    out = jax.block_until_ready(out)

    ref = _reference(points, labels, gauss, bg_w, not_obj_w, obj_w,
                     image_size=image_size)
    assert out.shape == (batch, nb_points, hidden)
    # Constant folding (4*pi/S into G) reassociates f32 ops feeding sin/cos with
    # O(1e2-1e3) angle magnitudes, so allow a slightly looser tolerance.
    assert jnp.allclose(out, ref, atol=2e-3, rtol=2e-3)

    print("KERNEL_OK")
</pallas_src>

<mosaic_0001>
module attributes {stable_mosaic.version = 11 : i64} {
  func.func @_point_embedding_kernel(%arg0: i32, %arg1: memref<16x2xf32, #tpu.memory_space<vmem>>, %arg2: memref<16x1xi32, #tpu.memory_space<vmem>>, %arg3: memref<2x16xf32, #tpu.memory_space<vmem>>, %arg4: memref<1x16xf32, #tpu.memory_space<vmem>>, %arg5: memref<1x32xf32, #tpu.memory_space<vmem>>, %arg6: memref<1x32xf32, #tpu.memory_space<vmem>>, %arg7: memref<1x32xf32, #tpu.memory_space<vmem>>, %arg8: memref<16x32xf32, #tpu.memory_space<vmem>>) attributes {dimension_semantics = [#tpu.dimension_semantics<parallel>], iteration_bounds = array<i64: 1>, scalar_prefetch = 0 : i64, scratch_operands = 0 : i64, tpu.core_type = #tpu.core_type<tc>, window_params = [{transform_indices = @transform_0, window_bounds = array<i64: 16, 2>}, {transform_indices = @transform_1, window_bounds = array<i64: 16, 1>}, {pipeline_mode = #tpu.pipeline_mode<synchronous>, transform_indices = @transform_2, window_bounds = array<i64: 2, 16>}, {pipeline_mode = #tpu.pipeline_mode<synchronous>, transform_indices = @transform_3, window_bounds = array<i64: 1, 16>}, {pipeline_mode = #tpu.pipeline_mode<synchronous>, transform_indices = @transform_4, window_bounds = array<i64: 1, 32>}, {pipeline_mode = #tpu.pipeline_mode<synchronous>, transform_indices = @transform_5, window_bounds = array<i64: 1, 32>}, {pipeline_mode = #tpu.pipeline_mode<synchronous>, transform_indices = @transform_6, window_bounds = array<i64: 1, 32>}, {transform_indices = @transform_7, window_bounds = array<i64: 16, 32>}]} {
    %c0 = arith.constant 0 : index
    %c0_0 = arith.constant 0 : index
    %0 = vector.load %arg1[%c0, %c0_0] : memref<16x2xf32, #tpu.memory_space<vmem>>, vector<16x2xf32>
    %1 = vector.extract_strided_slice %0 {offsets = [0, 0], sizes = [16, 1], strides = [1, 1]} : vector<16x2xf32> to vector<16x1xf32>
    %2 = vector.extract_strided_slice %0 {offsets = [0, 1], sizes = [16, 1], strides = [1, 1]} : vector<16x2xf32> to vector<16x1xf32>
    %c0_1 = arith.constant 0 : index
    %c0_2 = arith.constant 0 : index
    %3 = vector.load %arg3[%c0_1, %c0_2] : memref<2x16xf32, #tpu.memory_space<vmem>>, vector<1x16xf32>
    %4 = vector.broadcast %1 : vector<16x1xf32> to vector<16x16xf32>
    %5 = vector.broadcast %3 : vector<1x16xf32> to vector<16x16xf32>
    %6 = arith.mulf %4, %5 : vector<16x16xf32>
    %c1 = arith.constant 1 : index
    %c0_3 = arith.constant 0 : index
    %7 = vector.load %arg3[%c1, %c0_3] : memref<2x16xf32, #tpu.memory_space<vmem>>, vector<1x16xf32>
    %8 = vector.broadcast %2 : vector<16x1xf32> to vector<16x16xf32>
    %9 = vector.broadcast %7 : vector<1x16xf32> to vector<16x16xf32>
    %10 = arith.mulf %8, %9 : vector<16x16xf32>
    %11 = arith.addf %6, %10 : vector<16x16xf32>
    %c0_4 = arith.constant 0 : index
    %c0_5 = arith.constant 0 : index
    %12 = vector.load %arg4[%c0_4, %c0_5] : memref<1x16xf32, #tpu.memory_space<vmem>>, vector<1x16xf32>
    %13 = vector.broadcast %12 : vector<1x16xf32> to vector<16x16xf32>
    %14 = arith.addf %11, %13 : vector<16x16xf32>
    %c0_6 = arith.constant 0 : index
    %c0_7 = arith.constant 0 : index
    %15 = vector.load %arg2[%c0_6, %c0_7] : memref<16x1xi32, #tpu.memory_space<vmem>>, vector<16x1xi32>
    %c-1_i32 = arith.constant -1 : i32
    %16 = vector.broadcast %c-1_i32 : i32 to vector<16x1xi32>
    %17 = arith.cmpi eq, %15, %16 : vector<16x1xi32>
    %c0_i32 = arith.constant 0 : i32
    %18 = vector.broadcast %c0_i32 : i32 to vector<16x1xi32>
    %19 = arith.cmpi eq, %15, %18 : vector<16x1xi32>
    %c1_i32 = arith.constant 1 : i32
    %20 = vector.broadcast %c1_i32 : i32 to vector<16x1xi32>
    %21 = arith.cmpi eq, %15, %20 : vector<16x1xi32>
    %22 = math.sin %14 : vector<16x16xf32>
    %c0_8 = arith.constant 0 : index
    %c0_9 = arith.constant 0 : index
    %23 = vector.load %arg5[%c0_8, %c0_9] : memref<1x32xf32, #tpu.memory_space<vmem>>, vector<1x16xf32>
    %c0_10 = arith.constant 0 : index
    %c0_11 = arith.constant 0 : index
    %24 = vector.load %arg6[%c0_10, %c0_11] : memref<1x32xf32, #tpu.memory_space<vmem>>, vector<1x16xf32>
    %c0_12 = arith.constant 0 : index
    %c0_13 = arith.constant 0 : index
    %25 = vector.load %arg7[%c0_12, %c0_13] : memref<1x32xf32, #tpu.memory_space<vmem>>, vector<1x16xf32>
    %cst = arith.constant 0.000000e+00 : f32
    %26 = vector.shape_cast %21 : vector<16x1xi1> to vector<16x1xi1>
    %27 = vector.broadcast %26 : vector<16x1xi1> to vector<16x16xi1>
    %28 = vector.shape_cast %25 : vector<1x16xf32> to vector<1x16xf32>
    %29 = vector.broadcast %28 : vector<1x16xf32> to vector<16x16xf32>
    %30 = vector.broadcast %cst : f32 to vector<16x16xf32>
    %31 = arith.select %27, %29, %30 : vector<16x16xi1>, vector<16x16xf32>
    %32 = vector.shape_cast %19 : vector<16x1xi1> to vector<16x1xi1>
    %33 = vector.broadcast %32 : vector<16x1xi1> to vector<16x16xi1>
    %34 = vector.shape_cast %24 : vector<1x16xf32> to vector<1x16xf32>
    %35 = vector.broadcast %34 : vector<1x16xf32> to vector<16x16xf32>
    %36 = arith.select %33, %35, %31 : vector<16x16xi1>, vector<16x16xf32>
    %37 = arith.addf %22, %36 : vector<16x16xf32>
    %38 = vector.shape_cast %17 : vector<16x1xi1> to vector<16x1xi1>
    %39 = vector.broadcast %38 : vector<16x1xi1> to vector<16x16xi1>
    %40 = vector.shape_cast %23 : vector<1x16xf32> to vector<1x16xf32>
    %41 = vector.broadcast %40 : vector<1x16xf32> to vector<16x16xf32>
    %42 = arith.select %39, %41, %37 : vector<16x16xi1>, vector<16x16xf32>
    %c0_14 = arith.constant 0 : index
    %c0_15 = arith.constant 0 : index
    %43 = vector.load %arg8[%c0_14, %c0_15] : memref<16x32xf32, #tpu.memory_space<vmem>>, vector<16x16xf32>
    tpu.vector_store %arg8[%c0_14, %c0_15], %42 {strides = array<i32>} : memref<16x32xf32, #tpu.memory_space<vmem>>, vector<16x16xf32>,
    %44 = math.cos %14 : vector<16x16xf32>
    %c0_16 = arith.constant 0 : index
    %c16 = arith.constant 16 : index
    %45 = vector.load %arg5[%c0_16, %c16] : memref<1x32xf32, #tpu.memory_space<vmem>>, vector<1x16xf32>
    %c0_17 = arith.constant 0 : index
    %c16_18 = arith.constant 16 : index
    %46 = vector.load %arg6[%c0_17, %c16_18] : memref<1x32xf32, #tpu.memory_space<vmem>>, vector<1x16xf32>
    %c0_19 = arith.constant 0 : index
    %c16_20 = arith.constant 16 : index
    %47 = vector.load %arg7[%c0_19, %c16_20] : memref<1x32xf32, #tpu.memory_space<vmem>>, vector<1x16xf32>
    %cst_21 = arith.constant 0.000000e+00 : f32
    %48 = vector.shape_cast %21 : vector<16x1xi1> to vector<16x1xi1>
    %49 = vector.broadcast %48 : vector<16x1xi1> to vector<16x16xi1>
    %50 = vector.shape_cast %47 : vector<1x16xf32> to vector<1x16xf32>
    %51 = vector.broadcast %50 : vector<1x16xf32> to vector<16x16xf32>
    %52 = vector.broadcast %cst_21 : f32 to vector<16x16xf32>
    %53 = arith.select %49, %51, %52 : vector<16x16xi1>, vector<16x16xf32>
    %54 = vector.shape_cast %19 : vector<16x1xi1> to vector<16x1xi1>
    %55 = vector.broadcast %54 : vector<16x1xi1> to vector<16x16xi1>
    %56 = vector.shape_cast %46 : vector<1x16xf32> to vector<1x16xf32>
    %57 = vector.broadcast %56 : vector<1x16xf32> to vector<16x16xf32>
    %58 = arith.select %55, %57, %53 : vector<16x16xi1>, vector<16x16xf32>
    %59 = arith.addf %44, %58 : vector<16x16xf32>
    %60 = vector.shape_cast %17 : vector<16x1xi1> to vector<16x1xi1>
    %61 = vector.broadcast %60 : vector<16x1xi1> to vector<16x16xi1>
    %62 = vector.shape_cast %45 : vector<1x16xf32> to vector<1x16xf32>
    %63 = vector.broadcast %62 : vector<1x16xf32> to vector<16x16xf32>
    %64 = arith.select %61, %63, %59 : vector<16x16xi1>, vector<16x16xf32>
    %c0_22 = arith.constant 0 : index
    %c16_23 = arith.constant 16 : index
    %65 = vector.load %arg8[%c0_22, %c16_23] : memref<16x32xf32, #tpu.memory_space<vmem>>, vector<16x16xf32>
    tpu.vector_store %arg8[%c0_22, %c16_23], %64 {strides = array<i32>} : memref<16x32xf32, #tpu.memory_space<vmem>>, vector<16x16xf32>,
    return
  }
  func.func @transform_0(%arg0: i32) -> (i32, i32) {
    %c0_i32 = arith.constant 0 : i32
    %c0_i32_0 = arith.constant 0 : i32
    return %arg0, %c0_i32 : i32, i32
  }
  func.func @transform_1(%arg0: i32) -> (i32, i32) {
    %c0_i32 = arith.constant 0 : i32
    %c0_i32_0 = arith.constant 0 : i32
    return %arg0, %c0_i32 : i32, i32
  }
  func.func @transform_2(%arg0: i32) -> (i32, i32) {
    %c0_i32 = arith.constant 0 : i32
    %c0_i32_0 = arith.constant 0 : i32
    %c0_i32_1 = arith.constant 0 : i32
    return %c0_i32, %c0_i32_0 : i32, i32
  }
  func.func @transform_3(%arg0: i32) -> (i32, i32) {
    %c0_i32 = arith.constant 0 : i32
    %c0_i32_0 = arith.constant 0 : i32
    %c0_i32_1 = arith.constant 0 : i32
    return %c0_i32, %c0_i32_0 : i32, i32
  }
  func.func @transform_4(%arg0: i32) -> (i32, i32) {
    %c0_i32 = arith.constant 0 : i32
    %c0_i32_0 = arith.constant 0 : i32
    %c0_i32_1 = arith.constant 0 : i32
    return %c0_i32, %c0_i32_0 : i32, i32
  }
  func.func @transform_5(%arg0: i32) -> (i32, i32) {
    %c0_i32 = arith.constant 0 : i32
    %c0_i32_0 = arith.constant 0 : i32
    %c0_i32_1 = arith.constant 0 : i32
    return %c0_i32, %c0_i32_0 : i32, i32
  }
  func.func @transform_6(%arg0: i32) -> (i32, i32) {
    %c0_i32 = arith.constant 0 : i32
    %c0_i32_0 = arith.constant 0 : i32
    %c0_i32_1 = arith.constant 0 : i32
    return %c0_i32, %c0_i32_0 : i32, i32
  }
  func.func @transform_7(%arg0: i32) -> (i32, i32) {
    %c0_i32 = arith.constant 0 : i32
    %c0_i32_0 = arith.constant 0 : i32
    return %arg0, %c0_i32 : i32, i32
  }
}

</mosaic_0001>

<llo_original>
// kernel: tpu_custom_call.1
$region0: #{tpu_custom_call.1}
  #allocation0 [shape = 'u32[]', space=smem, size = 0x4, offset = 0x4, fixed_abs, tag = 'smem constant byte address 0x4 - core index']
  #allocation1 [shape = 'u32[144,128]{1,0:T(1,128)}', space=vmem, size = 0x12000, scoped, tag = 'internal scratch']
  %s0 = inlined_call_operand.vmem [shape: f32[16,2], index: 0, kind: input, shape index: {}]
  %s1 = inlined_call_operand.vmem [shape: s32[16,1], index: 1, kind: input, shape index: {}]
  %s2 = inlined_call_operand.vmem [shape: f32[2,16], index: 2, kind: input, shape index: {}]
  %s3 = inlined_call_operand.vmem [shape: f32[1,16], index: 3, kind: input, shape index: {}]
  %s4 = inlined_call_operand.vmem [shape: f32[1,32], index: 4, kind: input, shape index: {}]
  %s5 = inlined_call_operand.vmem [shape: f32[1,32], index: 5, kind: input, shape index: {}]
  %s6 = inlined_call_operand.vmem [shape: f32[1,32], index: 6, kind: input, shape index: {}]
  %s7 = inlined_call_operand.hbm [shape: f32[16,32], index: 7, kind: output, shape index: {}]
  %s8 = sld [smem:[#allocation0]]
  $region38: #{tpu_custom_call.1} parent=0
    _
  %s10 = ssub.s32 1, %s8
  %s11 = scalar_select 0, %s10, %s8
  $region1: #{tpu_custom_call.1} parent=0
    #allocation2 [shape = 'u8[8192]{0}', space=vmem, size = 0x2000, scoped, tag = 'output window, operand 0, single buffered']
    #allocation3 [shape = 's32[1]{0}', space=sflag, size = 0x4, scoped, tag = 'scoped memory for tpu_custom_call.1']
    %12 = vsyncpa [#allocation3], 0
    // Predicated region
    $region2: #{tpu_custom_call.1} parent=1 // pred_check
      _
    $region3: #{tpu_custom_call.1} parent=1 // pred_check_branch
      %14 = sbr.rel (0) target = $region5
    $region4: #{tpu_custom_call.1} parent=1 // pred_region
      _
    $region5: #{tpu_custom_call.1} parent=1 // pred_fallthru
      _
    // Predicated region
    $region6: #{tpu_custom_call.1} parent=1 // pred_check
      _
    $region7: #{tpu_custom_call.1} parent=1 // pred_check_branch
      %16 = sbr.rel (0) target = $region9
    $region8: #{tpu_custom_call.1} parent=1 // pred_region
      _
    $region9: #{tpu_custom_call.1} parent=1 // pred_fallthru
      _
    // Predicated region
    $region10: #{tpu_custom_call.1} parent=1 // pred_check
      _
    $region11: #{tpu_custom_call.1} parent=1 // pred_check_branch
      %18 = sbr.rel (0) target = $region13
    $region12: #{tpu_custom_call.1} parent=1 // pred_region
      _
    $region13: #{tpu_custom_call.1} parent=1 // pred_fallthru
      _
    // Predicated region
    $region14: #{tpu_custom_call.1} parent=1 // pred_check
      _
    $region15: #{tpu_custom_call.1} parent=1 // pred_check_branch
      %20 = sbr.rel (0) target = $region17
    $region16: #{tpu_custom_call.1} parent=1 // pred_region
      _
    $region17: #{tpu_custom_call.1} parent=1 // pred_fallthru
      _
    // Predicated region
    $region18: #{tpu_custom_call.1} parent=1 // pred_check
      _
    $region19: #{tpu_custom_call.1} parent=1 // pred_check_branch
      %22 = sbr.rel (0) target = $region21
    $region20: #{tpu_custom_call.1} parent=1 // pred_region
      _
    $region21: #{tpu_custom_call.1} parent=1 // pred_fallthru
      _
    // Predicated region
    $region22: #{tpu_custom_call.1} parent=1 // pred_check
      _
    $region23: #{tpu_custom_call.1} parent=1 // pred_check_branch
      %24 = sbr.rel (0) target = $region25
    $region24: #{tpu_custom_call.1} parent=1 // pred_region
      _
    $region25: #{tpu_custom_call.1} parent=1 // pred_fallthru
      _
    // Predicated region
    $region26: #{tpu_custom_call.1} parent=1 // pred_check
      _
    $region27: #{tpu_custom_call.1} parent=1 // pred_check_branch
      %26 = sbr.rel (0) target = $region29
    $region28: #{tpu_custom_call.1} parent=1 // pred_region
      _
    $region29: #{tpu_custom_call.1} parent=1 // pred_fallthru
      _
    %v27 = vld [vmem:[%s0] sm:$0xff]
    %v28 = vld [vmem:[%s0 + $0x8] sm:$0xff]
    %v29 = vld [vmem:[%s2] sm:$0x1]
    %31 = vset.pattern.permute.xlu0 0
    %32 = vperm.xlu0 %31, %v27
    %v33 = vpop.permute.xlu0 %32
    %36 = vset.pattern.permute.xlu0 0
    %37 = vperm.xlu0 %36, %v28
    %v38 = vpop.permute.xlu0 %37
    %v40 = vlaneseq
    %v41 = vshrl.u32 %v40, 7
    %v42 = vsub.s32 0, %v41
    %v43 = vrot.slane %v29, %v42
    %v44 = vmul.f32 %v33, %v43
    %v45 = vmul.f32 %v38, %v43
    %v46 = vld [vmem:[%s2 + $0x1] sm:$0x1]
    %47 = vset.pattern.permute.xlu0 1
    %48 = vperm.xlu0 %47, %v27
    %v49 = vpop.permute.xlu0 %48
    %51 = vset.pattern.permute.xlu0 1
    %52 = vperm.xlu0 %51, %v28
    %v53 = vpop.permute.xlu0 %52
    %v55 = vlaneseq
    %v56 = vshrl.u32 %v55, 7
    %v57 = vsub.s32 0, %v56
    %v58 = vrot.slane %v46, %v57
    %v59 = vmul.f32 %v49, %v58
    %v60 = vmul.f32 %v53, %v58
    %v61 = vadd.f32 %v44, %v59
    %v62 = vadd.f32 %v45, %v60
    %v63 = vld [vmem:[%s3] sm:$0x1]
    %v65 = vlaneseq
    %v66 = vshrl.u32 %v65, 7
    %v67 = vsub.s32 0, %v66
    %v68 = vrot.slane %v63, %v67
    %v70 = vadd.f32 %v61, %v68
    %v71 = vadd.f32 %v62, %v68
    %v72 = vld [vmem:[%s1] sm:$0xff]
    %v73 = vld [vmem:[%s1 + $0x8] sm:$0xff]
    %vm74 = vcmp.eq.s32.totalorder %v72, 4294967295
    %vm75 = vcmp.eq.s32.totalorder %v73, 4294967295
    %vm76 = vcmp.eq.s32.totalorder %v72, 0
    %vm77 = vcmp.eq.s32.totalorder %v73, 0
    %vm78 = vcmp.eq.s32.totalorder %v72, 1
    %vm79 = vcmp.eq.s32.totalorder %v73, 1
    %v80 = vand.u32 2147483647, %v70
    %vm81 = vcmp.le.f32.partialorder %v80, 0.7853982
    %vm82 = vcmp.lt.s32.totalorder %v70, 0
    %v83 = vand.u32 %v70, 2139095040
    %v84 = vshrl.u32 %v83, 23
    %v85 = vsub.s32 %v84, 127
    %v86 = vand.u32 2147483647, %v70
    %v87 = vand.u32 %v86, 8388607
    %v88 = vor.u32 %v87, 8388608
    %v89 = vsub.s32 0, %v88
    %v90 = vadd.s32 %v85, 1
    %vm91 = vcmp.gt.s32.totalorder %v90, 0
    %v92 = vsel %vm91, %v90, 0
    %v93 = vshrl.u32 %v92, 5
    %v94 = vand.u32 %v92, 31
    %v95 = vsub.s32 32, %v94
    %v96 = vshrl.u32 683565275, %v95
    %v97 = vshll.u32 683565275, %v94
    %v98 = vshrl.u32 2475754826, %v95
    %v99 = vor.u32 %v97, %v98
    %v100 = vshll.u32 2475754826, %v94
    %v101 = vshrl.u32 2131351028, %v95
    %v102 = vor.u32 %v100, %v101
    %v103 = vshll.u32 2131351028, %v94
    %v104 = vshrl.u32 2102212464, %v95
    %v105 = vor.u32 %v103, %v104
    %v106 = vshll.u32 2102212464, %v94
    %v107 = vshrl.u32 920167782, %v95
    %v108 = vor.u32 %v106, %v107
    %v109 = vshll.u32 920167782, %v94
    %v110 = vshrl.u32 1326507024, %v95
    %v111 = vor.u32 %v109, %v110
    %vm112 = vcmp.lt.s32.totalorder %v93, 1
    %vm113 = vcmp.lt.s32.totalorder %v93, 2
    %vm114 = vcmp.lt.s32.totalorder %v93, 3
    %vm115 = vcmp.lt.s32.totalorder %v93, 4
    %v116 = vsel %vm112, %v96, %v99
    %v117 = vsel %vm115, %v105, 2102212464
    %v118 = vsel %vm114, %v102, %v117
    %v119 = vsel %vm113, %v116, %v118
    %v120 = vsel %vm112, %v99, %v102
    %v121 = vsel %vm115, %v108, 920167782
    %v122 = vsel %vm114, %v105, %v121
    %v123 = vsel %vm113, %v120, %v122
    %v124 = vsel %vm112, %v102, %v105
    %v125 = vsel %vm115, %v111, 1326507024
    %v126 = vsel %vm114, %v108, %v125
    %v127 = vsel %vm113, %v124, %v126
    %v128 = vshll.u32 %v88, 8
    %v129 = vmul.u32.u64.compose %v128, %v127
    %v130 = vextract.low.u32 %v129
    %v131 = vextract.high.u32 %v129
    %v132 = vmul.u32.u64.compose %v128, %v123
    %v133 = vextract.low.u32 %v132
    %v134 = vextract.high.u32 %v132
    %v135 = vmul.u32 %v128, %v119
    %v136 = vadd.s32 %v131, %v133
    %vm137 = vc.u32 %v131, %v133
    %v138 = vadd.s32 %v134, 1
    %v139 = vsel %vm137, %v138, %v134
    %v140 = vadd.s32 %v135, %v139
    %v141 = vadd.s32 %v140, 536870912
    %v142 = vshrl.u32 %v141, 30
    %v143 = vshll.u32 %v142, 30
    %v144 = vsub.s32 %v140, %v143
    %vm145 = vcmp.lt.s32.totalorder %v144, 0
    %v146 = vsub.s32 0, %v144
    %v147 = vsel %vm145, %v146, %v144
    %v148 = vclz %v147
    %v149 = vsub.s32 %v148, 2
    %vm150 = vcmp.gt.s32.totalorder 0, %v149
    %v151 = vsel %vm150, 0, %v149
    %v152 = vsub.s32 32, %v151
    %v153 = vshll.u32 %v144, %v151
    %v154 = vshrl.u32 %v136, %v152
    %v155 = vor.u32 %v153, %v154
    %v156 = vsub.s32 4294967266, %v151
    %v157 = vadd.s32 %v156, 127
    %v158 = vshll.u32 %v157, 23
    %v159 = vor.u32 4788187, %v158
    %v160 = vand.u32 2147483647, %v159
    %v162 = vcvt.s32.f32 %v155
    %v163 = vmul.f32 %v162, %v160
    %v164 = vxor.u32 %v163, 2147483648
    %v165 = vsel %vm82, %v164, %v163
    %v166 = vsub.s32 4, %v142
    %v167 = vsel %vm82, %v166, %v142
    %v168 = vsel %vm81, %v70, %v165
    %v169 = vsel %vm81, 0, %v167
    %v170 = vcosq.f32.pop %v168
    %v171 = vsinq.f32.pop %v168
    %vm172 = vweird.f32 %v70
    %v173 = vadd.s32 %v169, 3
    %v174 = vand.u32 %v173, 3
    %vm175 = vcmp.lt.s32.totalorder %v174, 2
    %vm176 = vcmp.eq.s32.totalorder %v174, 0
    %v177 = vxor.u32 %v171, 2147483648
    %v178 = vsel %vm176, %v170, %v177
    %vm179 = vcmp.eq.s32.totalorder %v174, 2
    %v180 = vxor.u32 %v170, 2147483648
    %v181 = vsel %vm179, %v180, %v171
    %v182 = vsel %vm175, %v178, %v181
    %v183 = vsel %vm172, nan, %v182
    %v184 = vand.u32 2147483647, %v71
    %vm185 = vcmp.le.f32.partialorder %v184, 0.7853982
    %vm186 = vcmp.lt.s32.totalorder %v71, 0
    %v187 = vand.u32 %v71, 2139095040
    %v188 = vshrl.u32 %v187, 23
    %v189 = vsub.s32 %v188, 127
    %v190 = vand.u32 2147483647, %v71
    %v191 = vand.u32 %v190, 8388607
    %v192 = vor.u32 %v191, 8388608
    %v193 = vsub.s32 0, %v192
    %v194 = vadd.s32 %v189, 1
    %vm195 = vcmp.gt.s32.totalorder %v194, 0
    %v196 = vsel %vm195, %v194, 0
    %v197 = vshrl.u32 %v196, 5
    %v198 = vand.u32 %v196, 31
    %v199 = vsub.s32 32, %v198
    %v200 = vshrl.u32 683565275, %v199
    %v201 = vshll.u32 683565275, %v198
    %v202 = vshrl.u32 2475754826, %v199
    %v203 = vor.u32 %v201, %v202
    %v204 = vshll.u32 2475754826, %v198
    %v205 = vshrl.u32 2131351028, %v199
    %v206 = vor.u32 %v204, %v205
    %v207 = vshll.u32 2131351028, %v198
    %v208 = vshrl.u32 2102212464, %v199
    %v209 = vor.u32 %v207, %v208
    %v210 = vshll.u32 2102212464, %v198
    %v211 = vshrl.u32 920167782, %v199
    %v212 = vor.u32 %v210, %v211
    %v213 = vshll.u32 920167782, %v198
    %v214 = vshrl.u32 1326507024, %v199
    %v215 = vor.u32 %v213, %v214
    %vm216 = vcmp.lt.s32.totalorder %v197, 1
    %vm217 = vcmp.lt.s32.totalorder %v197, 2
    %vm218 = vcmp.lt.s32.totalorder %v197, 3
    %vm219 = vcmp.lt.s32.totalorder %v197, 4
    %v220 = vsel %vm216, %v200, %v203
    %v221 = vsel %vm219, %v209, 2102212464
    %v222 = vsel %vm218, %v206, %v221
    %v223 = vsel %vm217, %v220, %v222
    %v224 = vsel %vm216, %v203, %v206
    %v225 = vsel %vm219, %v212, 920167782
    %v226 = vsel %vm218, %v209, %v225
    %v227 = vsel %vm217, %v224, %v226
    %v228 = vsel %vm216, %v206, %v209
    %v229 = vsel %vm219, %v215, 1326507024
    %v230 = vsel %vm218, %v212, %v229
    %v231 = vsel %vm217, %v228, %v230
    %v232 = vshll.u32 %v192, 8
    %v233 = vmul.u32.u64.compose %v232, %v231
    %v234 = vextract.low.u32 %v233
    %v235 = vextract.high.u32 %v233
    %v236 = vmul.u32.u64.compose %v232, %v227
    %v237 = vextract.low.u32 %v236
    %v238 = vextract.high.u32 %v236
    %v239 = vmul.u32 %v232, %v223
    %v240 = vadd.s32 %v235, %v237
    %vm241 = vc.u32 %v235, %v237
    %v242 = vadd.s32 %v238, 1
    %v243 = vsel %vm241, %v242, %v238
    %v244 = vadd.s32 %v239, %v243
    %v245 = vadd.s32 %v244, 536870912
    %v246 = vshrl.u32 %v245, 30
    %v247 = vshll.u32 %v246, 30
    %v248 = vsub.s32 %v244, %v247
    %vm249 = vcmp.lt.s32.totalorder %v248, 0
    %v250 = vsub.s32 0, %v248
    %v251 = vsel %vm249, %v250, %v248
    %v252 = vclz %v251
    %v253 = vsub.s32 %v252, 2
    %vm254 = vcmp.gt.s32.totalorder 0, %v253
    %v255 = vsel %vm254, 0, %v253
    %v256 = vsub.s32 32, %v255
    %v257 = vshll.u32 %v248, %v255
    %v258 = vshrl.u32 %v240, %v256
    %v259 = vor.u32 %v257, %v258
    %v260 = vsub.s32 4294967266, %v255
    %v261 = vadd.s32 %v260, 127
    %v262 = vshll.u32 %v261, 23
    %v263 = vor.u32 4788187, %v262
    %v264 = vand.u32 2147483647, %v263
    %v266 = vcvt.s32.f32 %v259
    %v267 = vmul.f32 %v266, %v264
    %v268 = vxor.u32 %v267, 2147483648
    %v269 = vsel %vm186, %v268, %v267
    %v270 = vsub.s32 4, %v246
    %v271 = vsel %vm186, %v270, %v246
    %v272 = vsel %vm185, %v71, %v269
    %v273 = vsel %vm185, 0, %v271
    %v274 = vcosq.f32.pop %v272
    %v275 = vsinq.f32.pop %v272
    %vm276 = vweird.f32 %v71
    %v277 = vadd.s32 %v273, 3
    %v278 = vand.u32 %v277, 3
    %vm279 = vcmp.lt.s32.totalorder %v278, 2
    %vm280 = vcmp.eq.s32.totalorder %v278, 0
    %v281 = vxor.u32 %v275, 2147483648
    %v282 = vsel %vm280, %v274, %v281
    %vm283 = vcmp.eq.s32.totalorder %v278, 2
    %v284 = vxor.u32 %v274, 2147483648
    %v285 = vsel %vm283, %v284, %v275
    %v286 = vsel %vm279, %v282, %v285
    %v287 = vsel %vm276, nan, %v286
    %v288 = vld [vmem:[%s4] sm:$0x1]
    %v289 = vld [vmem:[%s5] sm:$0x1]
    %v290 = vld [vmem:[%s6] sm:$0x1]
    %v291 = vsel %vm78, 1, 0
    %v292 = vsel %vm79, 1, 0
    %293 = vset.pattern.permute.xlu0 0
    %294 = vperm.xlu0 %293, %v291
    %v295 = vpop.permute.xlu0 %294
    %296 = vset.pattern.permute.xlu0 0
    %297 = vperm.xlu0 %296, %v292
    %v298 = vpop.permute.xlu0 %297
    %vm299 = vcmp.eq.s32.totalorder %v295, 1
    %vm300 = vcmp.eq.s32.totalorder %v298, 1
    %v302 = vlaneseq
    %v303 = vshrl.u32 %v302, 7
    %v304 = vsub.s32 0, %v303
    %v305 = vrot.slane %v290, %v304
    %v307 = vsel %vm299, %v305, 0.0
    %v308 = vsel %vm300, %v305, 0.0
    %v309 = vsel %vm76, 1, 0
    %v310 = vsel %vm77, 1, 0
    %311 = vset.pattern.permute.xlu0 0
    %312 = vperm.xlu0 %311, %v309
    %v313 = vpop.permute.xlu0 %312
    %314 = vset.pattern.permute.xlu0 0
    %315 = vperm.xlu0 %314, %v310
    %v316 = vpop.permute.xlu0 %315
    %vm317 = vcmp.eq.s32.totalorder %v313, 1
    %vm318 = vcmp.eq.s32.totalorder %v316, 1
    %v320 = vlaneseq
    %v321 = vshrl.u32 %v320, 7
    %v322 = vsub.s32 0, %v321
    %v323 = vrot.slane %v289, %v322
    %v325 = vsel %vm317, %v323, %v307
    %v326 = vsel %vm318, %v323, %v308
    %v327 = vadd.f32 %v183, %v325
    %v328 = vadd.f32 %v287, %v326
    %v329 = vsel %vm74, 1, 0
    %v330 = vsel %vm75, 1, 0
    %331 = vset.pattern.permute.xlu0 0
    %332 = vperm.xlu0 %331, %v329
    %v333 = vpop.permute.xlu0 %332
    %334 = vset.pattern.permute.xlu0 0
    %335 = vperm.xlu0 %334, %v330
    %v336 = vpop.permute.xlu0 %335
    %vm337 = vcmp.eq.s32.totalorder %v333, 1
    %vm338 = vcmp.eq.s32.totalorder %v336, 1
    %v340 = vlaneseq
    %v341 = vshrl.u32 %v340, 7
    %v342 = vsub.s32 0, %v341
    %v343 = vrot.slane %v288, %v342
    %v345 = vsel %vm337, %v343, %v327
    %v346 = vsel %vm338, %v343, %v328
    %vm347 = vcmask 130048
    %348 = vst.msk [vmem:[#allocation2] sm:$0xff] %vm347, %v345
    %349 = vst.msk [vmem:[#allocation2 + $0x8] sm:$0xff] %vm347, %v346
    %v350 = vand.u32 2147483647, %v70
    %vm351 = vcmp.le.f32.partialorder %v350, 0.7853982
    %vm352 = vcmp.lt.s32.totalorder %v70, 0
    %v353 = vand.u32 %v70, 2139095040
    %v354 = vshrl.u32 %v353, 23
    %v355 = vsub.s32 %v354, 127
    %v356 = vand.u32 2147483647, %v70
    %v357 = vand.u32 %v356, 8388607
    %v358 = vor.u32 %v357, 8388608
    %v359 = vsub.s32 0, %v358
    %v360 = vadd.s32 %v355, 1
    %vm361 = vcmp.gt.s32.totalorder %v360, 0
    %v362 = vsel %vm361, %v360, 0
    %v363 = vshrl.u32 %v362, 5
    %v364 = vand.u32 %v362, 31
    %v365 = vsub.s32 32, %v364
    %v366 = vshrl.u32 683565275, %v365
    %v367 = vshll.u32 683565275, %v364
    %v368 = vshrl.u32 2475754826, %v365
    %v369 = vor.u32 %v367, %v368
    %v370 = vshll.u32 2475754826, %v364
    %v371 = vshrl.u32 2131351028, %v365
    %v372 = vor.u32 %v370, %v371
    %v373 = vshll.u32 2131351028, %v364
    %v374 = vshrl.u32 2102212464, %v365
    %v375 = vor.u32 %v373, %v374
    %v376 = vshll.u32 2102212464, %v364
    %v377 = vshrl.u32 920167782, %v365
    %v378 = vor.u32 %v376, %v377
    %v379 = vshll.u32 920167782, %v364
    %v380 = vshrl.u32 1326507024, %v365
    %v381 = vor.u32 %v379, %v380
    %vm382 = vcmp.lt.s32.totalorder %v363, 1
    %vm383 = vcmp.lt.s32.totalorder %v363, 2
    %vm384 = vcmp.lt.s32.totalorder %v363, 3
    %vm385 = vcmp.lt.s32.totalorder %v363, 4
    %v386 = vsel %vm382, %v366, %v369
    %v387 = vsel %vm385, %v375, 2102212464
    %v388 = vsel %vm384, %v372, %v387
    %v389 = vsel %vm383, %v386, %v388
    %v390 = vsel %vm382, %v369, %v372
    %v391 = vsel %vm385, %v378, 920167782
    %v392 = vsel %vm384, %v375, %v391
    %v393 = vsel %vm383, %v390, %v392
    %v394 = vsel %vm382, %v372, %v375
    %v395 = vsel %vm385, %v381, 1326507024
    %v396 = vsel %vm384, %v378, %v395
    %v397 = vsel %vm383, %v394, %v396
    %v398 = vshll.u32 %v358, 8
    %v399 = vmul.u32.u64.compose %v398, %v397
    %v400 = vextract.low.u32 %v399
    %v401 = vextract.high.u32 %v399
    %v402 = vmul.u32.u64.compose %v398, %v393
    %v403 = vextract.low.u32 %v402
    %v404 = vextract.high.u32 %v402
    %v405 = vmul.u32 %v398, %v389
    %v406 = vadd.s32 %v401, %v403
    %vm407 = vc.u32 %v401, %v403
    %v408 = vadd.s32 %v404, 1
    %v409 = vsel %vm407, %v408, %v404
    %v410 = vadd.s32 %v405, %v409
    %v411 = vadd.s32 %v410, 536870912
    %v412 = vshrl.u32 %v411, 30
    %v413 = vshll.u32 %v412, 30
    %v414 = vsub.s32 %v410, %v413
    %vm415 = vcmp.lt.s32.totalorder %v414, 0
    %v416 = vsub.s32 0, %v414
    %v417 = vsel %vm415, %v416, %v414
    %v418 = vclz %v417
    %v419 = vsub.s32 %v418, 2
    %vm420 = vcmp.gt.s32.totalorder 0, %v419
    %v421 = vsel %vm420, 0, %v419
    %v422 = vsub.s32 32, %v421
    %v423 = vshll.u32 %v414, %v421
    %v424 = vshrl.u32 %v406, %v422
    %v425 = vor.u32 %v423, %v424
    %v426 = vsub.s32 4294967266, %v421
    %v427 = vadd.s32 %v426, 127
    %v428 = vshll.u32 %v427, 23
    %v429 = vor.u32 4788187, %v428
    %v430 = vand.u32 2147483647, %v429
    %v432 = vcvt.s32.f32 %v425
    %v433 = vmul.f32 %v432, %v430
    %v434 = vxor.u32 %v433, 2147483648
    %v435 = vsel %vm352, %v434, %v433
    %v436 = vsub.s32 4, %v412
    %v437 = vsel %vm352, %v436, %v412
    %v438 = vsel %vm351, %v70, %v435
    %v439 = vsel %vm351, 0, %v437
    %v440 = vcosq.f32.pop %v438
    %v441 = vsinq.f32.pop %v438
    %vm442 = vweird.f32 %v70
    %v443 = vand.u32 %v439, 3
    %vm444 = vcmp.lt.s32.totalorder %v443, 2
    %vm445 = vcmp.eq.s32.totalorder %v443, 0
    %v446 = vxor.u32 %v441, 2147483648
    %v447 = vsel %vm445, %v440, %v446
    %vm448 = vcmp.eq.s32.totalorder %v443, 2
    %v449 = vxor.u32 %v440, 2147483648
    %v450 = vsel %vm448, %v449, %v441
    %v451 = vsel %vm444, %v447, %v450
    %v452 = vsel %vm442, nan, %v451
    %v453 = vand.u32 2147483647, %v71
    %vm454 = vcmp.le.f32.partialorder %v453, 0.7853982
    %vm455 = vcmp.lt.s32.totalorder %v71, 0
    %v456 = vand.u32 %v71, 2139095040
    %v457 = vshrl.u32 %v456, 23
    %v458 = vsub.s32 %v457, 127
    %v459 = vand.u32 2147483647, %v71
    %v460 = vand.u32 %v459, 8388607
    %v461 = vor.u32 %v460, 8388608
    %v462 = vsub.s32 0, %v461
    %v463 = vadd.s32 %v458, 1
    %vm464 = vcmp.gt.s32.totalorder %v463, 0
    %v465 = vsel %vm464, %v463, 0
    %v466 = vshrl.u32 %v465, 5
    %v467 = vand.u32 %v465, 31
    %v468 = vsub.s32 32, %v467
    %v469 = vshrl.u32 683565275, %v468
    %v470 = vshll.u32 683565275, %v467
    %v471 = vshrl.u32 2475754826, %v468
    %v472 = vor.u32 %v470, %v471
    %v473 = vshll.u32 2475754826, %v467
    %v474 = vshrl.u32 2131351028, %v468
    %v475 = vor.u32 %v473, %v474
    %v476 = vshll.u32 2131351028, %v467
    %v477 = vshrl.u32 2102212464, %v468
    %v478 = vor.u32 %v476, %v477
    %v479 = vshll.u32 2102212464, %v467
    %v480 = vshrl.u32 920167782, %v468
    %v481 = vor.u32 %v479, %v480
    %v482 = vshll.u32 920167782, %v467
    %v483 = vshrl.u32 1326507024, %v468
    %v484 = vor.u32 %v482, %v483
    %vm485 = vcmp.lt.s32.totalorder %v466, 1
    %vm486 = vcmp.lt.s32.totalorder %v466, 2
    %vm487 = vcmp.lt.s32.totalorder %v466, 3
    %vm488 = vcmp.lt.s32.totalorder %v466, 4
    %v489 = vsel %vm485, %v469, %v472
    %v490 = vsel %vm488, %v478, 2102212464
    %v491 = vsel %vm487, %v475, %v490
    %v492 = vsel %vm486, %v489, %v491
    %v493 = vsel %vm485, %v472, %v475
    %v494 = vsel %vm488, %v481, 920167782
    %v495 = vsel %vm487, %v478, %v494
    %v496 = vsel %vm486, %v493, %v495
    %v497 = vsel %vm485, %v475, %v478
    %v498 = vsel %vm488, %v484, 1326507024
    %v499 = vsel %vm487, %v481, %v498
    %v500 = vsel %vm486, %v497, %v499
    %v501 = vshll.u32 %v461, 8
    %v502 = vmul.u32.u64.compose %v501, %v500
    %v503 = vextract.low.u32 %v502
    %v504 = vextract.high.u32 %v502
    %v505 = vmul.u32.u64.compose %v501, %v496
    %v506 = vextract.low.u32 %v505
    %v507 = vextract.high.u32 %v505
    %v508 = vmul.u32 %v501, %v492
    %v509 = vadd.s32 %v504, %v506
    %vm510 = vc.u32 %v504, %v506
    %v511 = vadd.s32 %v507, 1
    %v512 = vsel %vm510, %v511, %v507
    %v513 = vadd.s32 %v508, %v512
    %v514 = vadd.s32 %v513, 536870912
    %v515 = vshrl.u32 %v514, 30
    %v516 = vshll.u32 %v515, 30
    %v517 = vsub.s32 %v513, %v516
    %vm518 = vcmp.lt.s32.totalorder %v517, 0
    %v519 = vsub.s32 0, %v517
    %v520 = vsel %vm518, %v519, %v517
    %v521 = vclz %v520
    %v522 = vsub.s32 %v521, 2
    %vm523 = vcmp.gt.s32.totalorder 0, %v522
    %v524 = vsel %vm523, 0, %v522
    %v525 = vsub.s32 32, %v524
    %v526 = vshll.u32 %v517, %v524
    %v527 = vshrl.u32 %v509, %v525
    %v528 = vor.u32 %v526, %v527
    %v529 = vsub.s32 4294967266, %v524
    %v530 = vadd.s32 %v529, 127
    %v531 = vshll.u32 %v530, 23
    %v532 = vor.u32 4788187, %v531
    %v533 = vand.u32 2147483647, %v532
    %v535 = vcvt.s32.f32 %v528
    %v536 = vmul.f32 %v535, %v533
    %v537 = vxor.u32 %v536, 2147483648
    %v538 = vsel %vm455, %v537, %v536
    %v539 = vsub.s32 4, %v515
    %v540 = vsel %vm455, %v539, %v515
    %v541 = vsel %vm454, %v71, %v538
    %v542 = vsel %vm454, 0, %v540
    %v543 = vcosq.f32.pop %v541
    %v544 = vsinq.f32.pop %v541
    %vm545 = vweird.f32 %v71
    %v546 = vand.u32 %v542, 3
    %vm547 = vcmp.lt.s32.totalorder %v546, 2
    %vm548 = vcmp.eq.s32.totalorder %v546, 0
    %v549 = vxor.u32 %v544, 2147483648
    %v550 = vsel %vm548, %v543, %v549
    %vm551 = vcmp.eq.s32.totalorder %v546, 2
    %v552 = vxor.u32 %v543, 2147483648
    %v553 = vsel %vm551, %v552, %v544
    %v554 = vsel %vm547, %v550, %v553
    %v555 = vsel %vm545, nan, %v554
    %v556 = vld [vmem:[%s4] sm:$0x1]
    %v557 = vld [vmem:[%s5] sm:$0x1]
    %v558 = vld [vmem:[%s6] sm:$0x1]
    %v560 = vlaneseq
    %v561 = vshrl.u32 %v560, 7
    %v562 = vsub.s32 0, %v561
    %v563 = vrot.slane %v558, %v562
    %v565 = vsel %vm299, %v563, 0.0
    %v566 = vsel %vm300, %v563, 0.0
    %v568 = vlaneseq
    %v569 = vshrl.u32 %v568, 7
    %v570 = vsub.s32 0, %v569
    %v571 = vrot.slane %v557, %v570
    %v573 = vsel %vm317, %v571, %v565
    %v574 = vsel %vm318, %v571, %v566
    %577 = vrot.lane.b32.xlu0 %v573, 112
    %v578 = vpop.permute.xlu0 %577
    %579 = vrot.lane.b32.xlu0 %v574, 112
    %v580 = vpop.permute.xlu0 %579
    %v583 = vadd.f32 %v452, %v578
    %v584 = vadd.f32 %v555, %v580
    %v586 = vlaneseq
    %v587 = vshrl.u32 %v586, 7
    %v588 = vsub.s32 0, %v587
    %v589 = vrot.slane %v556, %v588
    %593 = vrot.lane.b32.xlu0 %v583, 16
    %v594 = vpop.permute.xlu0 %593
    %595 = vrot.lane.b32.xlu0 %v584, 16
    %v596 = vpop.permute.xlu0 %595
    %v599 = vsel %vm337, %v589, %v594
    %v600 = vsel %vm338, %v589, %v596
    %vm601 = vcmask 261248
    %602 = vst.msk [vmem:[#allocation2] sm:$0xff] %vm601, %v599
    %603 = vst.msk [vmem:[#allocation2 + $0x8] sm:$0xff] %vm601, %v600
    // Predicated region
    $region30: #{tpu_custom_call.1} parent=1 // pred_check
      _
    $region31: #{tpu_custom_call.1} parent=1 // pred_check_branch
      %605 = sbr.rel (0) target = $region33
    $region32: #{tpu_custom_call.1} parent=1 // pred_region
      %s607 = ssub.s32 256, 256
      %608 = vsyncadd [#allocation3], %s607
      %s609 = sshll.u32 [#allocation2], 4
      %s610 = int_to_ptr.vmem [resolvable:$true] %s609
      %615 = dma.vmem_to_hbm [thread:$0]  %s610, 256, %s7, [#allocation3], 128, 128, 8
    $region33: #{tpu_custom_call.1} parent=1 // pred_fallthru
      _
    // Predicated region
    $region34: #{tpu_custom_call.1} parent=1 // pred_check
      _
    $region35: #{tpu_custom_call.1} parent=1 // pred_check_branch
      %617 = sbr.rel (0) target = $region37
    $region36: #{tpu_custom_call.1} parent=1 // pred_region
      %618 = dma.done [#allocation3], 256
    $region37: #{tpu_custom_call.1} parent=1 // pred_fallthru
      _
    %619 = vsyncpa [#allocation3], 1

</llo_original>
